<compile_context>
chip_gen: v7x
topology: tpu7x:2x2x1
jax: 0.10.0
libtpu: 0.0.40
codegen_flags: <defaults>
</compile_context>

<pallas_src>
import functools
import math

import jax
import jax.numpy as jnp
from jax.experimental import pallas as pl
from jax.experimental.pallas import tpu as pltpu

_LANE = 128
# Per-input-block budget.  BlockSpec double-buffers, so the pipelined working
# set is ~2x this plus the small resident output block; vmem_limit_bytes below
# is sized to cover it on every generation (v5e/v6e 128 MiB, v7x 64 MiB VMEM).
_BLOCK_BUDGET = 8 * 1024 * 1024


def _dtype_min(dtype):
    dtype = jnp.dtype(dtype)
    if jnp.issubdtype(dtype, jnp.floating):
        return jnp.array(-jnp.inf, dtype)
    if jnp.issubdtype(dtype, jnp.integer):
        return jnp.array(jnp.iinfo(dtype).min, dtype)
    return jnp.array(False, dtype)


def _sublane_multiple(dtype) -> int:
    # Packed sub-32-bit dtypes want 16 / 32 sublanes per tile.
    itemsize = jnp.dtype(dtype).itemsize
    if itemsize >= 4:
        return 8
    if itemsize == 2:
        return 16
    return 32


def _vmem_limit_bytes(in_block_bytes: int, out_block_bytes: int) -> int:
    """Explicit scoped-VMEM request: 2x double-buffered blocks + headroom,
    capped well below physical VMEM (64 MiB on v7x, 128 MiB on v5e/v6e)."""
    phys = 64 * 1024 * 1024  # conservative default if the query fails (v7x)
    try:
        phys = pltpu.get_tpu_info().vmem_capacity_bytes
    except Exception:
        pass
    cap = (phys * 3) // 4
    want = 2 * in_block_bytes + 2 * out_block_bytes + (4 << 20)
    return int(max(16 << 20, min(cap, want)))


def _pick_reduce_tile(k: int, max_t: int, step: int):
    """Largest reduction tile <= max_t (multiple of `step`).
    Prefers a tile that divides k evenly so no per-block masking is needed."""
    if k <= max_t:
        return k, False
    base = max(step, (max_t // step) * step)
    t = base
    for _ in range(64):
        if t < step:
            break
        if k % t == 0:
            if 2 * t >= base:     # only take the divisor if the block stays big
                return t, False
            break
        t -= step
    return base, (k % base != 0)


# ---------------------------------------------------------------------------
# Kernels
# ---------------------------------------------------------------------------

def _accum(o_ref, partial, kk):
    @pl.when(kk == 0)
    def _():
        o_ref[...] = partial

    @pl.when(kk > 0)
    def _():
        o_ref[...] = jnp.maximum(o_ref[...], partial)


def _max_mid_kernel(x_ref, o_ref, *, k_total, tk, mask_k):
    # x_ref: (tp, tk, tpost) -- reduce over axis 1 (K, sublane axis).
    # o_ref: (tp, tpost)     -- lane-dense; resident across the K grid axis.
    kk = pl.program_id(2)
    if not mask_k:
        _accum(o_ref, jnp.max(x_ref[...], axis=1), kk)
    else:
        last = pl.num_programs(2) - 1

        @pl.when(kk < last)            # unmasked fast path for all but last K block
        def _():
            _accum(o_ref, jnp.max(x_ref[...], axis=1), kk)

        @pl.when(kk == last)           # mask ragged tail only on the last K block
        def _():
            xb = x_ref[...]
            idx = jax.lax.broadcasted_iota(jnp.int32, xb.shape, 1)
            xb = jnp.where(kk * tk + idx < k_total, xb, _dtype_min(xb.dtype))
            _accum(o_ref, jnp.max(xb, axis=1), kk)


def _max_last_kernel(x_ref, o_ref, *, k_total, tk, mask_k):
    # dim == last-axis fallback.  x_ref: (tm, tk) reduce over lanes; o_ref: (tm, 1).
    kk = pl.program_id(1)
    if not mask_k:
        _accum(o_ref, jnp.max(x_ref[...], axis=1, keepdims=True), kk)
    else:
        last = pl.num_programs(1) - 1

        @pl.when(kk < last)
        def _():
            _accum(o_ref, jnp.max(x_ref[...], axis=1, keepdims=True), kk)

        @pl.when(kk == last)
        def _():
            xb = x_ref[...]
            idx = jax.lax.broadcasted_iota(jnp.int32, xb.shape, 1)
            xb = jnp.where(kk * tk + idx < k_total, xb, _dtype_min(xb.dtype))
            _accum(o_ref, jnp.max(xb, axis=1, keepdims=True), kk)


# ---------------------------------------------------------------------------
# pallas_call wrappers
# ---------------------------------------------------------------------------

def _reduce_mid(x3, pre, k, post):
    """x3: [pre, K, post]; returns [pre, post] = max over K."""
    dtype = x3.dtype
    itemsize = jnp.dtype(dtype).itemsize
    sub = _sublane_multiple(dtype)
    budget = _BLOCK_BUDGET

    # Lane tile over `post`: full extent if it fits, else a multiple of 128.
    if post * sub * itemsize <= budget:
        tpost = post
    else:
        tpost = max(_LANE, (budget // (sub * itemsize)) // _LANE * _LANE)

    # Sublane tile over K: prefer an even divisor of K; otherwise the largest
    # budget-sized multiple of the packing sublane count with last-block mask.
    max_tk = max(sub, (budget // (tpost * itemsize)) // sub * sub)
    tk, mask_k = _pick_reduce_tile(k, max_tk, sub)

    # Fold extra `pre` rows into the block with whatever budget remains.
    # Leading dim of a 3-D block is not subject to the (8,128) constraint.
    max_tp = max(1, budget // max(1, tk * tpost * itemsize))
    tp = min(pre, max_tp)

    # If the parallel grid is a single block but K spans several blocks, split
    # the parallel axis so v7x's two TensorCores can each take half the work.
    n_k = pl.cdiv(k, tk)
    if pl.cdiv(pre, tp) * pl.cdiv(post, tpost) == 1 and n_k >= 2:
        blk_bytes = tp * tk * tpost * itemsize
        if blk_bytes >= 4 * 1024 * 1024:
            if pre >= 2:
                tp = -(-pre // 2)
            elif post >= 2 * _LANE:
                tpost = pl.cdiv(pl.cdiv(post, 2), _LANE) * _LANE

    grid = (pl.cdiv(pre, tp), pl.cdiv(post, tpost), pl.cdiv(k, tk))

    in_block_bytes = tp * tk * tpost * itemsize
    out_block_bytes = tp * tpost * itemsize
    kernel = functools.partial(_max_mid_kernel, k_total=k, tk=tk, mask_k=mask_k)
    total = pre * k * post
    cost = pl.CostEstimate(flops=total, transcendentals=0,
                           bytes_accessed=(total + pre * post) * itemsize)

    return pl.pallas_call(
        kernel,
        out_shape=jax.ShapeDtypeStruct((pre, post), dtype),
        grid_spec=pltpu.PrefetchScalarGridSpec(
            num_scalar_prefetch=0,
            grid=grid,
            in_specs=[pl.BlockSpec((tp, tk, tpost), lambda p, j, kk: (p, kk, j))],
            out_specs=pl.BlockSpec((tp, tpost), lambda p, j, kk: (p, j)),
        ),
        compiler_params=pltpu.CompilerParams(
            dimension_semantics=("parallel", "parallel", "arbitrary"),
            vmem_limit_bytes=_vmem_limit_bytes(in_block_bytes, out_block_bytes)),
        cost_estimate=cost,
    )(x3)


def _reduce_last(x2, m, k):
    """x2: [M, K]; returns [M, 1] = max over the last (lane) axis."""
    dtype = x2.dtype
    itemsize = jnp.dtype(dtype).itemsize
    sub = _sublane_multiple(dtype)
    budget = _BLOCK_BUDGET

    # Lane tile over K (the reduction axis): prefer an even divisor of K.
    max_tk = max(_LANE, (budget // (sub * itemsize)) // _LANE * _LANE)
    tk, mask_k = _pick_reduce_tile(k, max_tk, _LANE)

    # Row tile: budget-driven multiple of the packing sublane count.
    tm = max(sub, (budget // max(1, tk * itemsize)) // sub * sub)
    if tm >= m:
        tm = m  # full extent

    # Give v7x's second TensorCore something to do for single-row-block shapes.
    if pl.cdiv(m, tm) == 1 and pl.cdiv(k, tk) >= 2 and m >= 2:
        if tm * tk * itemsize >= 4 * 1024 * 1024:
            tm = -(-m // 2)

    grid = (pl.cdiv(m, tm), pl.cdiv(k, tk))
    # TODO(synk): per review, a (tm, 128) VMEM scratch could keep the cross-lane
    # XLU reduce and (tm, 1) store out of the K loop; omitted (DMA-bound, <5%).
    kernel = functools.partial(_max_last_kernel, k_total=k, tk=tk, mask_k=mask_k)
    in_block_bytes = tm * tk * itemsize
    out_block_bytes = tm * itemsize
    cost = pl.CostEstimate(flops=m * k, transcendentals=0,
                           bytes_accessed=(m * k + m) * itemsize)

    return pl.pallas_call(
        kernel,
        out_shape=jax.ShapeDtypeStruct((m, 1), dtype),
        grid_spec=pltpu.PrefetchScalarGridSpec(
            num_scalar_prefetch=0,
            grid=grid,
            in_specs=[pl.BlockSpec((tm, tk), lambda i, kk: (i, kk))],
            out_specs=pl.BlockSpec((tm, 1), lambda i, kk: (i, 0)),
        ),
        compiler_params=pltpu.CompilerParams(
            dimension_semantics=("parallel", "arbitrary"),
            vmem_limit_bytes=_vmem_limit_bytes(in_block_bytes, out_block_bytes)),
        cost_estimate=cost,
    )(x2)


@functools.partial(jax.jit, static_argnames=("dim",))
def pallas_max(x: jax.Array, dim: int) -> jax.Array:
    """Equivalent of torch.max(x, dim=dim).values (values only)."""
    dim = dim % x.ndim
    shape = x.shape
    k = shape[dim]
    pre = math.prod(shape[:dim])
    post = math.prod(shape[dim + 1:])
    out_shape = shape[:dim] + shape[dim + 1:]

    if post == 1:
        # Reduction axis is (effectively) the last axis: reduce over lanes.
        out = _reduce_last(x.reshape(pre, k), pre, k)
    else:
        # Keep trailing axes lane-dense; no HBM transpose, only a free reshape.
        out = _reduce_mid(x.reshape(pre, k, post), pre, k, post)
    return out.reshape(out_shape)


if __name__ == "__main__":
    key = jax.random.PRNGKey(0)
    # NCHW-like input, reduce over the channel axis (dim=1): output (2, 16, 16).
    x = jax.random.normal(key, (2, 4, 16, 16), dtype=jnp.float32)

    out = jax.block_until_ready(pallas_max(x, dim=1))
    ref = jnp.max(x, axis=1)
    assert out.shape == ref.shape, (out.shape, ref.shape)
    assert out.dtype == ref.dtype, (out.dtype, ref.dtype)
    assert jnp.array_equal(out, ref), "mismatch vs. jnp.max reference (dim=1)"

    # dim == last-axis fallback path.
    out2 = jax.block_until_ready(pallas_max(x, dim=-1))
    assert jnp.array_equal(out2, jnp.max(x, axis=-1)), "mismatch (dim=-1)"

    # dim == 0 (pre == 1) path.
    out3 = jax.block_until_ready(pallas_max(x, dim=0))
    assert jnp.array_equal(out3, jnp.max(x, axis=0)), "mismatch (dim=0)"

    print("KERNEL_OK")
</pallas_src>

<mosaic_0001>
module attributes {stable_mosaic.version = 11 : i64} {
  func.func @_max_mid_kernel(%arg0: i32, %arg1: i32, %arg2: i32, %arg3: memref<2x4x256xf32, #tpu.memory_space<vmem>>, %arg4: memref<2x256xf32, #tpu.memory_space<vmem>>) attributes {dimension_semantics = [#tpu.dimension_semantics<parallel>, #tpu.dimension_semantics<parallel>, #tpu.dimension_semantics<arbitrary>], iteration_bounds = array<i64: 1, 1, 1>, scalar_prefetch = 0 : i64, scratch_operands = 0 : i64, tpu.core_type = #tpu.core_type<tc>, window_params = [{transform_indices = @transform_0, window_bounds = array<i64: 2, 4, 256>}, {transform_indices = @transform_1, window_bounds = array<i64: 2, 256>}]} {
    %c0 = arith.constant 0 : index
    %c0_0 = arith.constant 0 : index
    %c0_1 = arith.constant 0 : index
    %0 = vector.load %arg3[%c0, %c0_0, %c0_1] : memref<2x4x256xf32, #tpu.memory_space<vmem>>, vector<2x4x256xf32>
    %cst = arith.constant dense<0xFF800000> : vector<2x256xf32>
    %1 = vector.multi_reduction <maximumf>, %0, %cst [1] : vector<2x4x256xf32> to vector<2x256xf32>
    %c0_i32 = arith.constant 0 : i32
    %2 = arith.cmpi eq, %arg2, %c0_i32 : i32
    %3 = arith.extui %2 : i1 to i32
    %c0_i32_2 = arith.constant 0 : i32
    %4 = arith.cmpi ne, %3, %c0_i32_2 : i32
    scf.if %4 {
      %c0_5 = arith.constant 0 : index
      %c0_6 = arith.constant 0 : index
      %8 = vector.load %arg4[%c0_5, %c0_6] : memref<2x256xf32, #tpu.memory_space<vmem>>, vector<2x256xf32>
      tpu.vector_store %arg4[%c0_5, %c0_6], %1 {strides = array<i32>} : memref<2x256xf32, #tpu.memory_space<vmem>>, vector<2x256xf32>,
    } else {
    }
    %c0_i32_3 = arith.constant 0 : i32
    %5 = arith.cmpi sgt, %arg2, %c0_i32_3 : i32
    %6 = arith.extui %5 : i1 to i32
    %c0_i32_4 = arith.constant 0 : i32
    %7 = arith.cmpi ne, %6, %c0_i32_4 : i32
    scf.if %7 {
      %c0_5 = arith.constant 0 : index
      %c0_6 = arith.constant 0 : index
      %8 = vector.load %arg4[%c0_5, %c0_6] : memref<2x256xf32, #tpu.memory_space<vmem>>, vector<2x256xf32>
      %9 = arith.maximumf %8, %1 : vector<2x256xf32>
      %c0_7 = arith.constant 0 : index
      %c0_8 = arith.constant 0 : index
      %10 = vector.load %arg4[%c0_7, %c0_8] : memref<2x256xf32, #tpu.memory_space<vmem>>, vector<2x256xf32>
      tpu.vector_store %arg4[%c0_7, %c0_8], %9 {strides = array<i32>} : memref<2x256xf32, #tpu.memory_space<vmem>>, vector<2x256xf32>,
    } else {
    }
    return
  }
  func.func @transform_0(%arg0: i32, %arg1: i32, %arg2: i32) -> (i32, i32, i32) {
    %c0_i32 = arith.constant 0 : i32
    return %arg0, %arg2, %arg1 : i32, i32, i32
  }
  func.func @transform_1(%arg0: i32, %arg1: i32, %arg2: i32) -> (i32, i32) {
    %c0_i32 = arith.constant 0 : i32
    return %arg0, %arg1 : i32, i32
  }
}

</mosaic_0001>

<llo_original>
// kernel: pallas_max.1
$region0: #{pallas_max.1}
  #allocation0 [shape = 'u32[]', space=smem, size = 0x4, offset = 0x4, fixed_abs, tag = 'smem constant byte address 0x4 - core index']
  #allocation1 [shape = 'u32[144,128]{1,0:T(1,128)}', space=vmem, size = 0x12000, scoped, tag = 'internal scratch']
  %s0 = inlined_call_operand.vmem [shape: f32[2,4,256], index: 0, kind: input, shape index: {}]
  %s1 = inlined_call_operand.vmem [shape: f32[2,256], index: 1, kind: output, shape index: {}]
  %s2 = sld [smem:[#allocation0]]
  $region22: #{pallas_max.1} parent=0
    _
  %s4 = ssub.s32 1, %s2
  %s5 = scalar_select 0, %s4, %s2
  // Predicated region
  $region2: #{pallas_max.1} parent=0 // pred_check
    _
  $region3: #{pallas_max.1} parent=0 // pred_check_branch
    %7 = sbr.rel (0) target = $region5
  $region4: #{pallas_max.1} parent=0 // pred_region
    _
  $region5: #{pallas_max.1} parent=0 // pred_fallthru
    _
  %v8 = vld [vmem:[%s0] sm:$0xff]
  %v9 = vld [vmem:[%s0 + $0x8] sm:$0xff]
  %v12 = vcombine.high %v8, %v8
  %v13 = vcombine.high %v9, %v9
  %vm16 = vcmask 1043456
  %v17 = vsel %vm16, %v8, -inf
  %v18 = vrot.slane %v17, 4
  %v19 = vmax.f32 %v17, %v18
  %v20 = vrot.slane %v19, 2
  %v21 = vmax.f32 %v19, %v20
  %v22 = vrot.slane %v21, 1
  %v23 = vmax.f32 %v21, %v22
  %v24 = vsel %vm16, %v12, -inf
  %v25 = vrot.slane %v24, 4
  %v26 = vmax.f32 %v24, %v25
  %v27 = vrot.slane %v26, 2
  %v28 = vmax.f32 %v26, %v27
  %v29 = vrot.slane %v28, 1
  %v30 = vmax.f32 %v28, %v29
  %v31 = vsel %vm16, %v9, -inf
  %v32 = vrot.slane %v31, 4
  %v33 = vmax.f32 %v31, %v32
  %v34 = vrot.slane %v33, 2
  %v35 = vmax.f32 %v33, %v34
  %v36 = vrot.slane %v35, 1
  %v37 = vmax.f32 %v35, %v36
  %v38 = vsel %vm16, %v13, -inf
  %v39 = vrot.slane %v38, 4
  %v40 = vmax.f32 %v38, %v39
  %v41 = vrot.slane %v40, 2
  %v42 = vmax.f32 %v40, %v41
  %v43 = vrot.slane %v42, 1
  %v44 = vmax.f32 %v42, %v43
  %p45 = scmp.eq.s32.totalorder 0, 0
  // Predicated region
  $region6: #{pallas_max.1} parent=0 // pred_check
    %p46 = pneg %p45
  $region7: #{pallas_max.1} parent=0 // pred_check_branch
    %48 = sbr.rel (%p46) target = $region9
  $region8: #{pallas_max.1} parent=0 // pred_region
    %v53 = vcombine.low %v23, %v30
    %v55 = vunpack.c.l.s4 1983009808
    %v56 = vunpack.c.0.s8 %v55
    %v57 = vlaneseq
    %v58 = vshrl.u32 %v57, 7
    %v59 = vsub.s32 %v56, %v58
    %v60 = vrot.slane %v53, %v59
    %v61 = vcombine.low %v37, %v44
    %v63 = vunpack.c.l.s4 1983009808
    %v64 = vunpack.c.0.s8 %v63
    %v65 = vlaneseq
    %v66 = vshrl.u32 %v65, 7
    %v67 = vsub.s32 %v64, %v66
    %v68 = vrot.slane %v61, %v67
    %vm69 = vcmask 1044484
    %v70 = vsel %vm69, %v60, %v60
    %vm71 = vcmask 1046534
    %v72 = vsel %vm71, %v60, %v70
    %v73 = vrot.slane %v68, 7
    %vm74 = vcmask 1041409
    %v75 = vsel %vm74, %v73, %v72
    %vm76 = vcmask 1043459
    %v77 = vsel %vm76, %v73, %v75
    %vm78 = vcmask 1045509
    %v79 = vsel %vm78, %v73, %v77
    %vm80 = vcmask 1047559
    %v81 = vsel %vm80, %v73, %v79
    %83 = vst [vmem:[%s1] sm:$0xf] %v81
  $region9: #{pallas_max.1} parent=0 // pred_fallthru
    _
  %p84 = scmp.gt.s32.totalorder 0, 0
  // Predicated region
  $region10: #{pallas_max.1} parent=0 // pred_check
    %p85 = pneg %p84
  $region11: #{pallas_max.1} parent=0 // pred_check_branch
    %87 = sbr.rel (%p85) target = $region13
  $region12: #{pallas_max.1} parent=0 // pred_region
    %v88 = vld [vmem:[%s1] sm:$0xf]
    %v93 = vcombine.low %v23, %v30
    %v95 = vunpack.c.l.s4 1983009808
    %v96 = vunpack.c.0.s8 %v95
    %v97 = vlaneseq
    %v98 = vshrl.u32 %v97, 7
    %v99 = vsub.s32 %v96, %v98
    %v100 = vrot.slane %v93, %v99
    %v101 = vcombine.low %v37, %v44
    %v103 = vunpack.c.l.s4 1983009808
    %v104 = vunpack.c.0.s8 %v103
    %v105 = vlaneseq
    %v106 = vshrl.u32 %v105, 7
    %v107 = vsub.s32 %v104, %v106
    %v108 = vrot.slane %v101, %v107
    %vm109 = vcmask 1044484
    %v110 = vsel %vm109, %v100, %v100
    %vm111 = vcmask 1046534
    %v112 = vsel %vm111, %v100, %v110
    %v113 = vrot.slane %v108, 7
    %vm114 = vcmask 1041409
    %v115 = vsel %vm114, %v113, %v112
    %vm116 = vcmask 1043459
    %v117 = vsel %vm116, %v113, %v115
    %vm118 = vcmask 1045509
    %v119 = vsel %vm118, %v113, %v117
    %vm120 = vcmask 1047559
    %v121 = vsel %vm120, %v113, %v119
    %v123 = vmax.f32 %v88, %v121
    %124 = vst [vmem:[%s1] sm:$0xf] %v123
  $region13: #{pallas_max.1} parent=0 // pred_fallthru
    _
  // Predicated region
  $region14: #{pallas_max.1} parent=0 // pred_check
    _
  $region15: #{pallas_max.1} parent=0 // pred_check_branch
    %126 = sbr.rel (0) target = $region17
  $region16: #{pallas_max.1} parent=0 // pred_region
    _
  $region17: #{pallas_max.1} parent=0 // pred_fallthru
    _
  // Predicated region
  $region18: #{pallas_max.1} parent=0 // pred_check
    _
  $region19: #{pallas_max.1} parent=0 // pred_check_branch
    %128 = sbr.rel (0) target = $region21
  $region20: #{pallas_max.1} parent=0 // pred_region
    _
  $region21: #{pallas_max.1} parent=0 // pred_fallthru
    _

</llo_original>
